<compile_context>
chip_gen: v7x
topology: tpu7x:2x2x1
jax: 0.10.0
libtpu: 0.0.40
codegen_flags: <defaults>
</compile_context>

<pallas_src>
import jax
import jax.numpy as jnp
from jax.experimental import pallas as pl
from jax.experimental.pallas import tpu as pltpu


def mlp_kernel(x_ref, wg_ref, wu_ref, wd_ref, o_ref, acc_ref):
    # x_ref  : (tm, H)  bf16 token tile
    # wg_ref : (H, ti)  bf16 gate_proj tile (pre-transposed at init)
    # wu_ref : (H, ti)  bf16 up_proj tile   (pre-transposed at init)
    # wd_ref : (ti, H)  bf16 down_proj tile (pre-transposed at init)
    # o_ref  : (tm, H)  output tile (resident across the I/k grid axis)
    # acc_ref: (tm, H)  f32 accumulator scratch
    k = pl.program_id(1)

    @pl.when(k == 0)
    def _():
        acc_ref[...] = jnp.zeros_like(acc_ref)

    x = x_ref[...]
    # Canonical (m,k)x(k,n) MXU matmuls, f32 accumulation.
    g = jnp.dot(x, wg_ref[...], preferred_element_type=jnp.float32)
    u = jnp.dot(x, wu_ref[...], preferred_element_type=jnp.float32)
    # Matches the PyTorch module: gate_proj(x) * SiLU(up_proj(x))  (SiLU on the up branch)
    h = g * (u * jax.nn.sigmoid(u))
    acc_ref[...] += jnp.dot(h.astype(wd_ref.dtype), wd_ref[...],
                            preferred_element_type=jnp.float32)

    @pl.when(k == pl.num_programs(1) - 1)
    def _():
        o_ref[...] = acc_ref[...].astype(o_ref.dtype)


def prepare_mlp_params(w_gate, w_up, w_down, compute_dtype=jnp.bfloat16):
    """One-time (init) weight prep: PyTorch [out_features, in_features] weights ->
    transposed + cast to the compute dtype, so the forward path does no per-call
    weight casts/transposes.
      gate/up: (I, H) -> (H, I)    down: (H, I) -> (I, H)
    """
    wg_t = jnp.asarray(w_gate).T.astype(compute_dtype)
    wu_t = jnp.asarray(w_up).T.astype(compute_dtype)
    wd_t = jnp.asarray(w_down).T.astype(compute_dtype)
    return wg_t, wu_t, wd_t


def _pick_ti(I, target):
    """Largest lane-aligned (256-, then 128-multiple) divisor of I that is <= target."""
    if I <= target:
        return I
    for step in (256, 128):
        c = (min(target, I) // step) * step
        while c >= step:
            if I % c == 0:
                return c
            c -= step
    # TODO(synk): handle a ragged last k-block; for now fall back to a single k-step.
    return I


def _vmem_budget_bytes():
    cap = None
    try:
        cap = getattr(pltpu.get_tpu_info(), "vmem_capacity_bytes", None)
    except Exception:
        cap = None
    if not cap:
        # Conservative default (known to compile cleanly on the test device).
        return 64 * 1024 * 1024
    # Leave headroom for compiler-internal scratch; never ask for more than 112 MiB.
    return int(max(32 * 1024 * 1024, min(cap - 8 * 1024 * 1024, 112 * 1024 * 1024)))


def mlp_pallas(x, wg_t, wu_t, wd_t, *, tm=None, ti=None, vmem_limit_bytes=None):
    """x: [B, S, H].  Weights pre-transposed/cast via prepare_mlp_params:
       wg_t, wu_t: (H, I); wd_t: (I, H)."""
    B, S, H = x.shape
    I = wg_t.shape[1]
    assert wg_t.shape == (H, I) and wu_t.shape == (H, I) and wd_t.shape == (I, H)
    T = B * S
    out_dtype = x.dtype
    compute_dtype = wg_t.dtype

    # Only the (small) activation is cast per call; weights were prepped at init.
    x2 = x.reshape(T, H).astype(compute_dtype)

    if vmem_limit_bytes is None:
        vmem_limit_bytes = _vmem_budget_bytes()

    # Generation-aware tile targets: large token tile on 128 MiB parts (v5e/v6e),
    # smaller weight tile under v7x's 64 MiB VMEM (arithmetic intensity comes from tm).
    if vmem_limit_bytes >= 96 * 1024 * 1024:
        tm_target, ti_target = 1024, 512
    else:
        tm_target, ti_target = 768, 256

    if ti is None:
        ti = _pick_ti(I, ti_target)
    ti = min(ti, I)
    assert I % ti == 0, "intermediate tile must divide intermediate_size"

    itemsize = jnp.dtype(compute_dtype).itemsize
    if tm is None:
        # Fit token tiles in the budget remaining after double-buffered weight tiles.
        # Per (token, H) element: x + out double-buffered bf16 (8 B) + f32 acc (4 B).
        wt_bytes = 3 * 2 * ti * H * itemsize
        tok_budget = max(0, vmem_limit_bytes - wt_bytes)
        tm = int(min(tm_target, max(16, tok_budget // (12 * H))))
    # Megacore (v7x): keep >=2 blocks along the parallel token axis when worthwhile.
    if T >= 512:
        tm = min(tm, max(256, ((pl.cdiv(T, 2) + 255) // 256) * 256))
    tm = min(tm, T)
    if tm < T:
        tm = max(16, (tm // 16) * 16)   # bf16 packs 16 rows per vreg sublane group

    grid = (pl.cdiv(T, tm), I // ti)    # reduction (I) axis last

    out2 = pl.pallas_call(
        mlp_kernel,
        out_shape=jax.ShapeDtypeStruct((T, H), out_dtype),
        grid_spec=pltpu.PrefetchScalarGridSpec(
            num_scalar_prefetch=0,
            grid=grid,
            in_specs=[
                pl.BlockSpec((tm, H), lambda i, k: (i, 0)),   # x token tile
                pl.BlockSpec((H, ti), lambda i, k: (0, k)),   # gate_proj^T tile
                pl.BlockSpec((H, ti), lambda i, k: (0, k)),   # up_proj^T tile
                pl.BlockSpec((ti, H), lambda i, k: (k, 0)),   # down_proj^T tile
            ],
            out_specs=pl.BlockSpec((tm, H), lambda i, k: (i, 0)),
            scratch_shapes=[pltpu.VMEM((tm, H), jnp.float32)],
        ),
        compiler_params=pltpu.CompilerParams(
            dimension_semantics=("parallel", "arbitrary"),
            vmem_limit_bytes=int(vmem_limit_bytes),
        ),
    )(x2, wg_t, wu_t, wd_t)

    return out2.reshape(B, S, H)


def mlp_reference(x, w_gate, w_up, w_down):
    # Pure-JAX f32 reference matching the PyTorch module (weights in [out, in] layout).
    g = jnp.einsum("bsh,ih->bsi", x, w_gate)
    u = jnp.einsum("bsh,ih->bsi", x, w_up)
    h = g * (u * jax.nn.sigmoid(u))
    return jnp.einsum("bsi,hi->bsh", h, w_down)


if __name__ == "__main__":
    # Small config: batch=2, seq=8, hidden=32, intermediate=64
    B, S, H, I = 2, 8, 32, 64
    key = jax.random.PRNGKey(0)
    kx, kg, ku, kd = jax.random.split(key, 4)

    x = jax.random.normal(kx, (B, S, H), dtype=jnp.float32)
    # Deterministic weights in PyTorch nn.Linear convention: [out, in]
    w_gate = jax.random.normal(kg, (I, H), dtype=jnp.float32) * 0.05
    w_up = jax.random.normal(ku, (I, H), dtype=jnp.float32) * 0.05
    w_down = jax.random.normal(kd, (H, I), dtype=jnp.float32) * 0.05

    # One-time weight prep (transpose + bf16 cast) — this is init-time work in a model.
    wg_t, wu_t, wd_t = prepare_mlp_params(w_gate, w_up, w_down)

    out = mlp_pallas(x, wg_t, wu_t, wd_t)
    out = jax.block_until_ready(out)

    ref = mlp_reference(x, w_gate, w_up, w_down)
    assert out.shape == (B, S, H)
    # bf16 matmul inputs with f32 accumulation -> bf16-level tolerance vs f32 reference.
    assert jnp.allclose(out, ref, atol=2e-3, rtol=2e-2), "mismatch vs reference"

    print("KERNEL_OK")
</pallas_src>

<mosaic_0001>
module attributes {stable_mosaic.version = 11 : i64} {
  func.func @mlp_kernel(%arg0: i32, %arg1: i32, %arg2: memref<16x32xbf16, #tpu.memory_space<vmem>>, %arg3: memref<32x64xbf16, #tpu.memory_space<vmem>>, %arg4: memref<32x64xbf16, #tpu.memory_space<vmem>>, %arg5: memref<64x32xbf16, #tpu.memory_space<vmem>>, %arg6: memref<16x32xf32, #tpu.memory_space<vmem>>, %arg7: memref<16x32xf32, #tpu.memory_space<vmem>>) attributes {dimension_semantics = [#tpu.dimension_semantics<parallel>, #tpu.dimension_semantics<arbitrary>], iteration_bounds = array<i64: 1, 1>, scalar_prefetch = 0 : i64, scratch_operands = 1 : i64, tpu.core_type = #tpu.core_type<tc>, window_params = [{transform_indices = @transform_0, window_bounds = array<i64: 16, 32>}, {transform_indices = @transform_1, window_bounds = array<i64: 32, 64>}, {transform_indices = @transform_2, window_bounds = array<i64: 32, 64>}, {transform_indices = @transform_3, window_bounds = array<i64: 64, 32>}, {transform_indices = @transform_4, window_bounds = array<i64: 16, 32>}]} {
    %c0_i32 = arith.constant 0 : i32
    %0 = arith.cmpi eq, %arg1, %c0_i32 : i32
    %1 = arith.extui %0 : i1 to i32
    %c0_i32_0 = arith.constant 0 : i32
    %2 = arith.cmpi ne, %1, %c0_i32_0 : i32
    scf.if %2 {
      %cst_17 = arith.constant 0.000000e+00 : f32
      %24 = vector.broadcast %cst_17 : f32 to vector<16x32xf32>
      %c0_18 = arith.constant 0 : index
      %c0_19 = arith.constant 0 : index
      %25 = vector.load %arg7[%c0_18, %c0_19] : memref<16x32xf32, #tpu.memory_space<vmem>>, vector<16x32xf32>
      tpu.vector_store %arg7[%c0_18, %c0_19], %24 {strides = array<i32>} : memref<16x32xf32, #tpu.memory_space<vmem>>, vector<16x32xf32>,
    } else {
    }
    %c0 = arith.constant 0 : index
    %c0_1 = arith.constant 0 : index
    %3 = vector.load %arg2[%c0, %c0_1] : memref<16x32xbf16, #tpu.memory_space<vmem>>, vector<16x32xbf16>
    %c0_2 = arith.constant 0 : index
    %c0_3 = arith.constant 0 : index
    %4 = vector.load %arg3[%c0_2, %c0_3] : memref<32x64xbf16, #tpu.memory_space<vmem>>, vector<32x64xbf16>
    %cst = arith.constant dense<0.000000e+00> : vector<16x64xf32>
    %5 = tpu.matmul %3, %4, %cst {dimension_numbers = #tpu.dot_dimension_numbers<[1], [0], [0], [1], [0, 0, 1, 1], [], []>} : vector<16x32xbf16>, vector<32x64xbf16>, vector<16x64xf32> -> vector<16x64xf32>
    %c0_4 = arith.constant 0 : index
    %c0_5 = arith.constant 0 : index
    %6 = vector.load %arg4[%c0_4, %c0_5] : memref<32x64xbf16, #tpu.memory_space<vmem>>, vector<32x64xbf16>
    %cst_6 = arith.constant dense<0.000000e+00> : vector<16x64xf32>
    %7 = tpu.matmul %3, %6, %cst_6 {dimension_numbers = #tpu.dot_dimension_numbers<[1], [0], [0], [1], [0, 0, 1, 1], [], []>} : vector<16x32xbf16>, vector<32x64xbf16>, vector<16x64xf32> -> vector<16x64xf32>
    %8 = arith.negf %7 : vector<16x64xf32>
    %9 = math.exp %8 : vector<16x64xf32>
    %cst_7 = arith.constant 1.000000e+00 : f32
    %10 = vector.broadcast %cst_7 : f32 to vector<16x64xf32>
    %11 = arith.addf %10, %9 : vector<16x64xf32>
    %12 = arith.divf %10, %11 : vector<16x64xf32>
    %13 = arith.mulf %7, %12 : vector<16x64xf32>
    %14 = arith.mulf %5, %13 : vector<16x64xf32>
    %c0_8 = arith.constant 0 : index
    %c0_9 = arith.constant 0 : index
    %15 = vector.load %arg7[%c0_8, %c0_9] : memref<16x32xf32, #tpu.memory_space<vmem>>, vector<16x32xf32>
    %16 = arith.truncf %14 : vector<16x64xf32> to vector<16x64xbf16>
    %c0_10 = arith.constant 0 : index
    %c0_11 = arith.constant 0 : index
    %17 = vector.load %arg5[%c0_10, %c0_11] : memref<64x32xbf16, #tpu.memory_space<vmem>>, vector<64x32xbf16>
    %cst_12 = arith.constant dense<0.000000e+00> : vector<16x32xf32>
    %18 = tpu.matmul %16, %17, %cst_12 {dimension_numbers = #tpu.dot_dimension_numbers<[1], [0], [0], [1], [0, 0, 1, 1], [], []>} : vector<16x64xbf16>, vector<64x32xbf16>, vector<16x32xf32> -> vector<16x32xf32>
    %19 = arith.addf %15, %18 : vector<16x32xf32>
    %c0_13 = arith.constant 0 : index
    %c0_14 = arith.constant 0 : index
    %20 = vector.load %arg7[%c0_13, %c0_14] : memref<16x32xf32, #tpu.memory_space<vmem>>, vector<16x32xf32>
    tpu.vector_store %arg7[%c0_13, %c0_14], %19 {strides = array<i32>} : memref<16x32xf32, #tpu.memory_space<vmem>>, vector<16x32xf32>,
    %c0_i32_15 = arith.constant 0 : i32
    %21 = arith.cmpi eq, %arg1, %c0_i32_15 : i32
    %22 = arith.extui %21 : i1 to i32
    %c0_i32_16 = arith.constant 0 : i32
    %23 = arith.cmpi ne, %22, %c0_i32_16 : i32
    scf.if %23 {
      %c0_17 = arith.constant 0 : index
      %c0_18 = arith.constant 0 : index
      %24 = vector.load %arg7[%c0_17, %c0_18] : memref<16x32xf32, #tpu.memory_space<vmem>>, vector<16x32xf32>
      %c0_19 = arith.constant 0 : index
      %c0_20 = arith.constant 0 : index
      %25 = vector.load %arg6[%c0_19, %c0_20] : memref<16x32xf32, #tpu.memory_space<vmem>>, vector<16x32xf32>
      tpu.vector_store %arg6[%c0_19, %c0_20], %24 {strides = array<i32>} : memref<16x32xf32, #tpu.memory_space<vmem>>, vector<16x32xf32>,
    } else {
    }
    return
  }
  func.func @transform_0(%arg0: i32, %arg1: i32) -> (i32, i32) {
    %c0_i32 = arith.constant 0 : i32
    %c0_i32_0 = arith.constant 0 : i32
    return %arg0, %c0_i32 : i32, i32
  }
  func.func @transform_1(%arg0: i32, %arg1: i32) -> (i32, i32) {
    %c0_i32 = arith.constant 0 : i32
    %c0_i32_0 = arith.constant 0 : i32
    return %c0_i32, %arg1 : i32, i32
  }
  func.func @transform_2(%arg0: i32, %arg1: i32) -> (i32, i32) {
    %c0_i32 = arith.constant 0 : i32
    %c0_i32_0 = arith.constant 0 : i32
    return %c0_i32, %arg1 : i32, i32
  }
  func.func @transform_3(%arg0: i32, %arg1: i32) -> (i32, i32) {
    %c0_i32 = arith.constant 0 : i32
    %c0_i32_0 = arith.constant 0 : i32
    return %arg1, %c0_i32 : i32, i32
  }
  func.func @transform_4(%arg0: i32, %arg1: i32) -> (i32, i32) {
    %c0_i32 = arith.constant 0 : i32
    %c0_i32_0 = arith.constant 0 : i32
    return %arg0, %c0_i32 : i32, i32
  }
}

</mosaic_0001>

<llo_original>
// kernel: tpu_custom_call.1
$region0: #{tpu_custom_call.1}
  #allocation0 [shape = 'u32[]', space=smem, size = 0x4, offset = 0x4, fixed_abs, tag = 'smem constant byte address 0x4 - core index']
  #allocation1 [shape = 'u32[144,128]{1,0:T(1,128)}', space=vmem, size = 0x12000, scoped, tag = 'internal scratch']
  #allocation2 [shape = 'f32[16,32]{1,0:T(8,128)}', space=vmem, size = 0x2000, scoped, tag = 'scratch operand']
  %s0 = inlined_call_operand.hbm [shape: bf16[16,32], index: 0, kind: input, shape index: {}]
  %s1 = inlined_call_operand.hbm [shape: bf16[32,64], index: 1, kind: input, shape index: {}]
  %s2 = inlined_call_operand.hbm [shape: bf16[32,64], index: 2, kind: input, shape index: {}]
  %s3 = inlined_call_operand.hbm [shape: bf16[64,32], index: 3, kind: input, shape index: {}]
  %s4 = inlined_call_operand.hbm [shape: f32[16,32], index: 4, kind: output, shape index: {}]
  %s5 = sld [smem:[#allocation0]]
  $region50: #{tpu_custom_call.1} parent=0
    _
  %s7 = ssub.s32 1, %s5
  %s8 = scalar_select 0, %s7, %s5
  $region1: #{tpu_custom_call.1} parent=0
    #allocation3 [shape = 'u8[4096]{0}', space=vmem, size = 0x1000, scoped, tag = 'input window, operand 0, single buffered']
    #allocation4 [shape = 's32[1]{0}', space=sflag, size = 0x4, scoped, tag = 'scoped memory for tpu_custom_call.1']
    #allocation5 [shape = 's32[1]{0}', space=sflag, size = 0x4, scoped, tag = 'scoped memory for tpu_custom_call.1']
    #allocation6 [shape = 'u8[8192]{0}', space=vmem, size = 0x2000, scoped, tag = 'input window, operand 1, single buffered']
    #allocation7 [shape = 's32[1]{0}', space=sflag, size = 0x4, scoped, tag = 'scoped memory for tpu_custom_call.1']
    #allocation8 [shape = 'u8[8192]{0}', space=vmem, size = 0x2000, scoped, tag = 'input window, operand 2, single buffered']
    #allocation9 [shape = 'u8[16384]{0}', space=vmem, size = 0x4000, scoped, tag = 'input window, operand 3, single buffered']
    #allocation10 [shape = 's32[1]{0}', space=sflag, size = 0x4, scoped, tag = 'scoped memory for tpu_custom_call.1']
    #allocation11 [shape = 'u8[8192]{0}', space=vmem, size = 0x2000, scoped, tag = 'output window, operand 0, single buffered']
    %9 = vsyncpa [#allocation4], 0
    %10 = vsyncpa [#allocation7], 0
    %11 = vsyncpa [#allocation10], 0
    %12 = vsyncpa [#allocation5], 0
    // Predicated region
    $region2: #{tpu_custom_call.1} parent=1 // pred_check
      _
    $region3: #{tpu_custom_call.1} parent=1 // pred_check_branch
      %14 = sbr.rel (0) target = $region5
    $region4: #{tpu_custom_call.1} parent=1 // pred_region
      %s16 = ssub.s32 128, 128
      %17 = vsyncadd [#allocation4], %s16
      %s18 = sshll.u32 [#allocation3], 4
      %s19 = int_to_ptr.vmem [resolvable:$true] %s18
      %24 = dma.hbm_to_vmem [thread:$0]  %s0, 128, %s19, [#allocation4], 64, 64, 4
    $region5: #{tpu_custom_call.1} parent=1 // pred_fallthru
      _
    // Predicated region
    $region6: #{tpu_custom_call.1} parent=1 // pred_check
      _
    $region7: #{tpu_custom_call.1} parent=1 // pred_check_branch
      %26 = sbr.rel (0) target = $region9
    $region8: #{tpu_custom_call.1} parent=1 // pred_region
      %s28 = ssub.s32 256, 256
      %29 = vsyncadd [#allocation7], %s28
      %s30 = sshll.u32 [#allocation6], 4
      %s31 = int_to_ptr.vmem [resolvable:$true] %s30
      %36 = dma.hbm_to_vmem [thread:$0]  %s1, 256, %s31, [#allocation7], 64, 64, 4
    $region9: #{tpu_custom_call.1} parent=1 // pred_fallthru
      _
    // Predicated region
    $region10: #{tpu_custom_call.1} parent=1 // pred_check
      _
    $region11: #{tpu_custom_call.1} parent=1 // pred_check_branch
      %38 = sbr.rel (0) target = $region13
    $region12: #{tpu_custom_call.1} parent=1 // pred_region
      %s40 = ssub.s32 256, 256
      %41 = vsyncadd [#allocation7], %s40
      %s42 = sshll.u32 [#allocation8], 4
      %s43 = int_to_ptr.vmem [resolvable:$true] %s42
      %48 = dma.hbm_to_vmem [thread:$0]  %s2, 256, %s43, [#allocation7], 64, 64, 4
    $region13: #{tpu_custom_call.1} parent=1 // pred_fallthru
      _
    // Predicated region
    $region14: #{tpu_custom_call.1} parent=1 // pred_check
      _
    $region15: #{tpu_custom_call.1} parent=1 // pred_check_branch
      %50 = sbr.rel (0) target = $region17
    $region16: #{tpu_custom_call.1} parent=1 // pred_region
      %s52 = ssub.s32 512, 512
      %53 = vsyncadd [#allocation10], %s52
      %s54 = sshll.u32 [#allocation9], 4
      %s55 = int_to_ptr.vmem [resolvable:$true] %s54
      %60 = dma.hbm_to_vmem [thread:$0]  %s3, 512, %s55, [#allocation10], 64, 64, 4
    $region17: #{tpu_custom_call.1} parent=1 // pred_fallthru
      _
    // Predicated region
    $region18: #{tpu_custom_call.1} parent=1 // pred_check
      _
    $region19: #{tpu_custom_call.1} parent=1 // pred_check_branch
      %62 = sbr.rel (0) target = $region21
    $region20: #{tpu_custom_call.1} parent=1 // pred_region
      %63 = dma.done [#allocation4], 128
    $region21: #{tpu_custom_call.1} parent=1 // pred_fallthru
      _
    // Predicated region
    $region22: #{tpu_custom_call.1} parent=1 // pred_check
      _
    $region23: #{tpu_custom_call.1} parent=1 // pred_check_branch
      %65 = sbr.rel (0) target = $region25
    $region24: #{tpu_custom_call.1} parent=1 // pred_region
      %66 = dma.done [#allocation7], 256
    $region25: #{tpu_custom_call.1} parent=1 // pred_fallthru
      _
    // Predicated region
    $region26: #{tpu_custom_call.1} parent=1 // pred_check
      _
    $region27: #{tpu_custom_call.1} parent=1 // pred_check_branch
      %68 = sbr.rel (0) target = $region29
    $region28: #{tpu_custom_call.1} parent=1 // pred_region
      %69 = dma.done [#allocation7], 256
    $region29: #{tpu_custom_call.1} parent=1 // pred_fallthru
      _
    // Predicated region
    $region30: #{tpu_custom_call.1} parent=1 // pred_check
      _
    $region31: #{tpu_custom_call.1} parent=1 // pred_check_branch
      %71 = sbr.rel (0) target = $region33
    $region32: #{tpu_custom_call.1} parent=1 // pred_region
      %72 = dma.done [#allocation10], 512
    $region33: #{tpu_custom_call.1} parent=1 // pred_fallthru
      _
    %p74 = scmp.eq.s32.totalorder 0, 0
    // Predicated region
    $region34: #{tpu_custom_call.1} parent=1 // pred_check
      %p75 = pneg %p74
    $region35: #{tpu_custom_call.1} parent=1 // pred_check_branch
      %77 = sbr.rel (%p75) target = $region37
    $region36: #{tpu_custom_call.1} parent=1 // pred_region
      %vm78 = vcmask 261120
      %79 = vst.msk [vmem:[#allocation2] sm:$0xff] %vm78, 0.0
      %80 = vst.msk [vmem:[#allocation2 + $0x8] sm:$0xff] %vm78, 0.0
    $region37: #{tpu_custom_call.1} parent=1 // pred_fallthru
      _
    %v81 = vld [vmem:[#allocation3] sm:$0xf]
    %v82 = vld [vmem:[#allocation3 + $0x4] sm:$0xf]
    %v83 = vld [vmem:[#allocation6] sm:$0xf]
    %v84 = vld [vmem:[#allocation6 + $0x4] sm:$0xf]
    %v85 = vld [vmem:[#allocation6 + $0x8] sm:$0xf]
    %v86 = vld [vmem:[#allocation6 + $0xc] sm:$0xf]
    %v89 = vunpack.c.l.b16 %v81
    %v90 = vunpack.c.l.b16 %v82
    %v91 = vpack.c.b16 %v90, %v89
    %v96 = vunpack.c.l.b16 %v83
    %v97 = vunpack.c.l.b16 %v84
    %v98 = vunpack.c.l.b16 %v85
    %v99 = vunpack.c.l.b16 %v86
    %v100 = vpack.c.b16 %v97, %v96
    %v101 = vpack.c.b16 %v99, %v98
    %vm104 = vcmask 261120
    %v106 = vsel %vm104, %v91, 0
    %108 = vmatprep.subr.bf16.mxu0 0
    %109 = vmatpush1.bf16.msra.mxu0 %v100
    %110 = vmatprep.subr.bf16.mxu0 0
    %111 = vmatpush1.bf16.msra.mxu0 %v101
    %112 = vmatprep.subr.bf16.mxu0 0
    %113 = vmatpush1.bf16.msra.mxu0 0
    %114 = vmatprep.subr.bf16.mxu0 0
    %115 = vmatpush1.bf16.msra.mxu0 0
    %116 = vmatprep.subr.bf16.mxu0 0
    %117 = vmatpush1.bf16.msra.mxu0 0
    %118 = vmatprep.subr.bf16.mxu0 0
    %119 = vmatpush1.bf16.msra.mxu0 0
    %120 = vmatprep.subr.bf16.mxu0 0
    %121 = vmatpush1.bf16.msra.mxu0 0
    %122 = vmatprep.subr.bf16.mxu0 0
    %123 = vmatpush1.bf16.msra.mxu0 0
    %124 = vmatprep.subr.bf16.mxu0 0
    %125 = vmatpush1.bf16.msra.mxu0 0
    %126 = vmatprep.subr.bf16.mxu0 0
    %127 = vmatpush1.bf16.msra.mxu0 0
    %128 = vmatprep.subr.bf16.mxu0 0
    %129 = vmatpush1.bf16.msra.mxu0 0
    %130 = vmatprep.subr.bf16.mxu0 0
    %131 = vmatpush1.bf16.msra.mxu0 0
    %132 = vmatprep.subr.bf16.mxu0 0
    %133 = vmatpush1.bf16.msra.mxu0 0
    %134 = vmatprep.subr.bf16.mxu0 0
    %135 = vmatpush1.bf16.msra.mxu0 0
    %136 = vmatprep.subr.bf16.mxu0 0
    %137 = vmatpush1.bf16.msra.mxu0 0
    %138 = vmatprep.subr.bf16.mxu0 0
    %139 = vmatpush1.bf16.msra.mxu0 0
    %140 = vmatprep.mubr.bf16.mxu0 0
    %141 = vmatmul.mubr.bf16.gmra.mrb[0].mxu0 %v106
    %v142 = vpop.f32.mrb[0].mxu0
    %v143 = vadd.f32 0.0, %v142
    %v144 = vpop.f32.mrb[0].mxu0
    %v145 = vpop.f32.mrb[0].mxu0
    %v146 = vadd.f32 0.0, %v145
    %v147 = vpop.f32.mrb[0].mxu0
    %148 = vdwg.mxu0
    %v149 = vld [vmem:[#allocation8] sm:$0xf]
    %v150 = vld [vmem:[#allocation8 + $0x4] sm:$0xf]
    %v151 = vld [vmem:[#allocation8 + $0x8] sm:$0xf]
    %v152 = vld [vmem:[#allocation8 + $0xc] sm:$0xf]
    %v157 = vunpack.c.l.b16 %v149
    %v158 = vunpack.c.l.b16 %v150
    %v159 = vunpack.c.l.b16 %v151
    %v160 = vunpack.c.l.b16 %v152
    %v161 = vpack.c.b16 %v158, %v157
    %v162 = vpack.c.b16 %v160, %v159
    %165 = vmatprep.subr.bf16.mxu0 0
    %166 = vmatpush1.bf16.msra.mxu0 %v161
    %167 = vmatprep.subr.bf16.mxu0 0
    %168 = vmatpush1.bf16.msra.mxu0 %v162
    %169 = vmatprep.subr.bf16.mxu0 0
    %170 = vmatpush1.bf16.msra.mxu0 0
    %171 = vmatprep.subr.bf16.mxu0 0
    %172 = vmatpush1.bf16.msra.mxu0 0
    %173 = vmatprep.subr.bf16.mxu0 0
    %174 = vmatpush1.bf16.msra.mxu0 0
    %175 = vmatprep.subr.bf16.mxu0 0
    %176 = vmatpush1.bf16.msra.mxu0 0
    %177 = vmatprep.subr.bf16.mxu0 0
    %178 = vmatpush1.bf16.msra.mxu0 0
    %179 = vmatprep.subr.bf16.mxu0 0
    %180 = vmatpush1.bf16.msra.mxu0 0
    %181 = vmatprep.subr.bf16.mxu0 0
    %182 = vmatpush1.bf16.msra.mxu0 0
    %183 = vmatprep.subr.bf16.mxu0 0
    %184 = vmatpush1.bf16.msra.mxu0 0
    %185 = vmatprep.subr.bf16.mxu0 0
    %186 = vmatpush1.bf16.msra.mxu0 0
    %187 = vmatprep.subr.bf16.mxu0 0
    %188 = vmatpush1.bf16.msra.mxu0 0
    %189 = vmatprep.subr.bf16.mxu0 0
    %190 = vmatpush1.bf16.msra.mxu0 0
    %191 = vmatprep.subr.bf16.mxu0 0
    %192 = vmatpush1.bf16.msra.mxu0 0
    %193 = vmatprep.subr.bf16.mxu0 0
    %194 = vmatpush1.bf16.msra.mxu0 0
    %195 = vmatprep.subr.bf16.mxu0 0
    %196 = vmatpush1.bf16.msra.mxu0 0
    %197 = vmatprep.mubr.bf16.mxu0 0
    %198 = vmatmul.mubr.bf16.gmra.mrb[0].mxu0 %v106
    %v199 = vpop.f32.mrb[0].mxu0
    %v200 = vadd.f32 0.0, %v199
    %v201 = vpop.f32.mrb[0].mxu0
    %v202 = vpop.f32.mrb[0].mxu0
    %v203 = vadd.f32 0.0, %v202
    %v204 = vpop.f32.mrb[0].mxu0
    %205 = vdwg.mxu0
    %v206 = vxor.u32 %v200, 2147483648
    %v207 = vxor.u32 %v203, 2147483648
    %v208 = vmul.f32 %v206, 1.442695
    %v209 = vpow.pop %v208
    %v210 = vmul.f32 %v207, 1.442695
    %v211 = vpow.pop %v210
    %v212 = vadd.f32 %v209, 1.0
    %v213 = vadd.f32 %v211, 1.0
    %v214 = vrcp.pop %v212
    %v215 = vmul.f32 1.0, %v214
    %v216 = vrcp.pop %v213
    %v217 = vmul.f32 1.0, %v216
    %v218 = vmul.f32 %v200, %v215
    %v219 = vmul.f32 %v203, %v217
    %v220 = vmul.f32 %v143, %v218
    %v221 = vmul.f32 %v146, %v219
    %v222 = vld [vmem:[#allocation2] sm:$0xff]
    %v223 = vld [vmem:[#allocation2 + $0x8] sm:$0xff]
    %v224 = vpack.c.bf16 %v221, %v220
    %v225 = vld [vmem:[#allocation9] sm:$0xf]
    %v226 = vld [vmem:[#allocation9 + $0x4] sm:$0xf]
    %v227 = vld [vmem:[#allocation9 + $0x8] sm:$0xf]
    %v228 = vld [vmem:[#allocation9 + $0xc] sm:$0xf]
    %v229 = vld [vmem:[#allocation9 + $0x10] sm:$0xf]
    %v230 = vld [vmem:[#allocation9 + $0x14] sm:$0xf]
    %v231 = vld [vmem:[#allocation9 + $0x18] sm:$0xf]
    %v232 = vld [vmem:[#allocation9 + $0x1c] sm:$0xf]
    %v241 = vunpack.c.l.b16 %v225
    %v242 = vunpack.c.l.b16 %v226
    %v243 = vunpack.c.l.b16 %v227
    %v244 = vunpack.c.l.b16 %v228
    %v245 = vunpack.c.l.b16 %v229
    %v246 = vunpack.c.l.b16 %v230
    %v247 = vunpack.c.l.b16 %v231
    %v248 = vunpack.c.l.b16 %v232
    %v249 = vpack.c.b16 %v242, %v241
    %v250 = vpack.c.b16 %v244, %v243
    %v251 = vpack.c.b16 %v246, %v245
    %v252 = vpack.c.b16 %v248, %v247
    %vm257 = vcmask 523264
    %v259 = vsel %vm257, %v224, 0
    %261 = vmatprep.subr.bf16.mxu0 0
    %262 = vmatpush1.bf16.msra.mxu0 %v249
    %263 = vmatprep.subr.bf16.mxu0 0
    %264 = vmatpush1.bf16.msra.mxu0 %v250
    %265 = vmatprep.subr.bf16.mxu0 0
    %266 = vmatpush1.bf16.msra.mxu0 %v251
    %267 = vmatprep.subr.bf16.mxu0 0
    %268 = vmatpush1.bf16.msra.mxu0 %v252
    %269 = vmatprep.subr.bf16.mxu0 0
    %270 = vmatpush1.bf16.msra.mxu0 0
    %271 = vmatprep.subr.bf16.mxu0 0
    %272 = vmatpush1.bf16.msra.mxu0 0
    %273 = vmatprep.subr.bf16.mxu0 0
    %274 = vmatpush1.bf16.msra.mxu0 0
    %275 = vmatprep.subr.bf16.mxu0 0
    %276 = vmatpush1.bf16.msra.mxu0 0
    %277 = vmatprep.subr.bf16.mxu0 0
    %278 = vmatpush1.bf16.msra.mxu0 0
    %279 = vmatprep.subr.bf16.mxu0 0
    %280 = vmatpush1.bf16.msra.mxu0 0
    %281 = vmatprep.subr.bf16.mxu0 0
    %282 = vmatpush1.bf16.msra.mxu0 0
    %283 = vmatprep.subr.bf16.mxu0 0
    %284 = vmatpush1.bf16.msra.mxu0 0
    %285 = vmatprep.subr.bf16.mxu0 0
    %286 = vmatpush1.bf16.msra.mxu0 0
    %287 = vmatprep.subr.bf16.mxu0 0
    %288 = vmatpush1.bf16.msra.mxu0 0
    %289 = vmatprep.subr.bf16.mxu0 0
    %290 = vmatpush1.bf16.msra.mxu0 0
    %291 = vmatprep.subr.bf16.mxu0 0
    %292 = vmatpush1.bf16.msra.mxu0 0
    %293 = vmatprep.mubr.bf16.mxu0 0
    %294 = vmatmul.mubr.bf16.gmra.mrb[0].mxu0 %v259
    %v295 = vpop.f32.mrb[0].mxu0
    %v296 = vadd.f32 0.0, %v295
    %v297 = vpop.f32.mrb[0].mxu0
    %v298 = vpop.f32.mrb[0].mxu0
    %v299 = vadd.f32 0.0, %v298
    %v300 = vpop.f32.mrb[0].mxu0
    %301 = vdwg.mxu0
    %v302 = vadd.f32 %v222, %v296
    %v303 = vadd.f32 %v223, %v299
    %304 = vst.msk [vmem:[#allocation2] sm:$0xff] %vm104, %v302
    %305 = vst.msk [vmem:[#allocation2 + $0x8] sm:$0xff] %vm104, %v303
    // Predicated region
    $region38: #{tpu_custom_call.1} parent=1 // pred_check
      %p306 = pneg %p74
    $region39: #{tpu_custom_call.1} parent=1 // pred_check_branch
      %308 = sbr.rel (%p306) target = $region41
    $region40: #{tpu_custom_call.1} parent=1 // pred_region
      %v309 = vld [vmem:[#allocation2] sm:$0xff]
      %v310 = vld [vmem:[#allocation2 + $0x8] sm:$0xff]
      %311 = vst.msk [vmem:[#allocation11] sm:$0xff] %vm104, %v309
      %312 = vst.msk [vmem:[#allocation11 + $0x8] sm:$0xff] %vm104, %v310
    $region41: #{tpu_custom_call.1} parent=1 // pred_fallthru
      _
    // Predicated region
    $region42: #{tpu_custom_call.1} parent=1 // pred_check
      _
    $region43: #{tpu_custom_call.1} parent=1 // pred_check_branch
      %314 = sbr.rel (0) target = $region45
    $region44: #{tpu_custom_call.1} parent=1 // pred_region
      %s316 = ssub.s32 256, 256
      %317 = vsyncadd [#allocation5], %s316
      %s318 = sshll.u32 [#allocation11], 4
      %s319 = int_to_ptr.vmem [resolvable:$true] %s318
      %324 = dma.vmem_to_hbm [thread:$0]  %s319, 256, %s4, [#allocation5], 128, 128, 8
    $region45: #{tpu_custom_call.1} parent=1 // pred_fallthru
      _
    // Predicated region
    $region46: #{tpu_custom_call.1} parent=1 // pred_check
      _
    $region47: #{tpu_custom_call.1} parent=1 // pred_check_branch
      %326 = sbr.rel (0) target = $region49
    $region48: #{tpu_custom_call.1} parent=1 // pred_region
      %327 = dma.done [#allocation5], 256
    $region49: #{tpu_custom_call.1} parent=1 // pred_fallthru
      _
    %328 = vsyncpa [#allocation4], 1
    %329 = vsyncpa [#allocation7], 1
    %330 = vsyncpa [#allocation10], 1
    %331 = vsyncpa [#allocation5], 1

</llo_original>
